<compile_context>
chip_gen: v7x
topology: tpu7x:2x2x1
jax: 0.10.0
libtpu: 0.0.40
codegen_flags: <defaults>
</compile_context>

<pallas_src>
import functools

import jax
import jax.numpy as jnp
from jax.experimental import pallas as pl
from jax.experimental.pallas import tpu as pltpu

# -------- module hyperparameters (from __init__ defaults / constructor args) --------
KL_TEMP = 4.0
LOSS_WEIGHTS = (1.0, 1.0, 1.0)   # (ce, kd, policy)
NUM_CLASSES = 10

_MAX_TILE_B = 4096               # lane-padded (tile_b, C) buffers: ~2 MiB/buffer at 4096 (f32)


def _num_tensorcores_per_device():
    """2 on dual-TensorCore chips (v7x / v5p / v4 megacore), else 1 (v5e / v6e)."""
    try:
        kind = jax.devices()[0].device_kind.lower()
    except Exception:
        return 1
    if any(tag in kind for tag in ("v7", "tpu7", "v5p", "v4")):
        return 2
    return 1


def _policy_loss_kernel(labels_ref, s_ref, t_ref, out_ref, acc_ce, acc_kl, *,
                        kl_temp, total_b, masked):
    """One (TB, C) row tile: accumulate per-row CE / KL partials; emit per-core sums."""
    p = pl.program_id(0)                 # core-split axis ("parallel")
    i = pl.program_id(1)                 # batch-tile axis ("arbitrary" reduction)
    n_i = pl.num_programs(1)

    @pl.when(i == 0)
    def _init():
        acc_ce[...] = jnp.zeros_like(acc_ce)
        acc_kl[...] = jnp.zeros_like(acc_kl)

    s = s_ref[...].astype(jnp.float32)   # (TB, C) student logits
    t = t_ref[...].astype(jnp.float32)   # (TB, C) teacher logits
    labels = labels_ref[...]             # (TB, 1) int32 hard labels
    tb, c = s.shape
    inv_t = 1.0 / kl_temp

    # ---- student log-softmax pieces (shared by CE and KD) ----
    s_max = jnp.max(s, axis=1, keepdims=True)                        # (TB, 1)
    s_sh = s - s_max                                                 # (TB, C)
    lse_s = jnp.log(jnp.sum(jnp.exp(s_sh), axis=1, keepdims=True))   # (TB, 1)

    # ---- CE: logsumexp minus the logit gathered at the label (no (TB, C) log_softmax) ----
    lane = jax.lax.broadcasted_iota(jnp.int32, (tb, c), 1)
    gathered = jnp.sum(jnp.where(lane == labels, s_sh, 0.0), axis=1, keepdims=True)
    ce_row = lse_s - gathered                                        # (TB, 1)

    # ---- KD: KL(softmax(t/T) || softmax(s/T)) per row; teacher norm deferred to the row ----
    #   KL_row = (1/Z_t) * sum_c e_t * (tt_sh - st_sh) + logZ_s - logZ_t
    st_sh = s_sh * inv_t                                             # max(s/T) == max(s)/T
    lse_st = jnp.log(jnp.sum(jnp.exp(st_sh), axis=1, keepdims=True))
    tt = t * inv_t
    tt_sh = tt - jnp.max(tt, axis=1, keepdims=True)
    e_t = jnp.exp(tt_sh)
    z_t = jnp.sum(e_t, axis=1, keepdims=True)                        # (TB, 1)
    inner = jnp.sum(e_t * (tt_sh - st_sh), axis=1, keepdims=True)    # (TB, 1)
    kl_row = inner * pl.reciprocal(z_t, approx=False) + (lse_st - jnp.log(z_t))

    if masked:
        # Compiled in only when B is not tile-aligned or the core split has a clamped
        # duplicate tile.  Math is row-local, so garbage in padded rows cannot reach valid
        # rows; masking the reduced (TB, 1) columns is sufficient and cheap.
        row = jax.lax.broadcasted_iota(jnp.int32, (tb, 1), 0)
        tile_idx = p * n_i + i
        valid = (tile_idx * tb + row) < total_b
        ce_row = jnp.where(valid, ce_row, 0.0)
        kl_row = jnp.where(valid, kl_row, 0.0)

    acc_ce[...] += ce_row
    acc_kl[...] += kl_row

    @pl.when(i == n_i - 1)
    def _finalize():
        out_ref[0, 0] = jnp.sum(acc_ce[...])
        out_ref[0, 1] = jnp.sum(acc_kl[...])


def policy_loss_forward(student_logits, teacher_logits, targets,
                        kl_temp=KL_TEMP, loss_weights=LOSS_WEIGHTS,
                        tile_b=None, num_cores=None):
    b, c = student_logits.shape
    assert b % 2 == 0, "the batchsize mod 2 should be zero!"

    _, _, ct = targets.shape
    target = targets.reshape(-1, ct)
    if ct > 15:
        # TODO(synk): soft-label branch (KLDiv against soft targets) not implemented.
        raise NotImplementedError("soft-label branch not implemented")
    cls_target = target[:, 0].astype(jnp.int32)                      # (b*p,) hard labels (.long())
    assert cls_target.shape[0] == b, "CE expects one hard label per logit row (p == 1)"
    labels2d = cls_target.reshape(b, 1)

    if num_cores is None:
        num_cores = _num_tensorcores_per_device()

    # ---- batch tiling over rows of the original (B, C) arrays (no transposes anywhere) ----
    if tile_b is None:
        if num_cores >= 2 and b >= 2 * 128:
            # one big tile per core when possible, capped for VMEM (lane-padded buffers)
            tile_b = max(128, min((b // num_cores) // 128 * 128, _MAX_TILE_B))
        else:
            tile_b = b if b <= _MAX_TILE_B else _MAX_TILE_B
    assert tile_b == b or tile_b % 128 == 0, "tile_b must equal b or be 128-aligned"

    n_tiles = pl.cdiv(b, tile_b)
    n_splits = num_cores if n_tiles >= num_cores else 1
    tiles_per_core = pl.cdiv(n_tiles, n_splits)
    # Static: ragged last tile or duplicated (clamped) tiles exist -> per-row mask needed.
    masked = (b % tile_b != 0) or (n_splits * tiles_per_core != n_tiles)

    def row_block(pi, ii):
        j = pi * tiles_per_core + ii
        return jnp.minimum(j, n_tiles - 1)       # clamp; duplicates fully masked in-kernel

    kernel = functools.partial(_policy_loss_kernel, kl_temp=float(kl_temp),
                               total_b=int(b), masked=bool(masked))

    itemsize = jnp.dtype(student_logits.dtype).itemsize
    cost = pl.CostEstimate(
        flops=int(20 * b * c + 12 * b),
        transcendentals=int(3 * b * c + 4 * b),
        bytes_accessed=int(2 * b * c * itemsize + 4 * b + 8 * n_splits),
    )

    partials = pl.pallas_call(
        kernel,
        out_shape=jax.ShapeDtypeStruct((n_splits, 2), jnp.float32),
        grid=(n_splits, tiles_per_core),
        in_specs=[
            pl.BlockSpec((tile_b, 1), lambda pi, ii: (row_block(pi, ii), 0)),
            pl.BlockSpec((tile_b, c), lambda pi, ii: (row_block(pi, ii), 0)),
            pl.BlockSpec((tile_b, c), lambda pi, ii: (row_block(pi, ii), 0)),
        ],
        out_specs=pl.BlockSpec((1, 2), lambda pi, ii: (pi, 0),
                               memory_space=pltpu.MemorySpace.SMEM),
        scratch_shapes=[pltpu.VMEM((tile_b, 1), jnp.float32),
                        pltpu.VMEM((tile_b, 1), jnp.float32)],
        compiler_params=pltpu.CompilerParams(
            dimension_semantics=("parallel", "arbitrary"),
            vmem_limit_bytes=32 * 1024 * 1024,
        ),
        cost_estimate=cost,
    )(labels2d, student_logits, teacher_logits)

    # Divisors use the FULL batch, not per-tile sizes; cross-core partials summed here.
    ce = jnp.sum(partials[:, 0]) / b
    kl = jnp.sum(partials[:, 1]) / (b * c) * (kl_temp ** 2)
    w_ce, w_kl, w_policy = loss_weights
    return w_ce * ce + w_kl * kl + w_policy * 0.0       # policy term is literally 0.0 in forward()


def _reference_forward(student_logits, teacher_logits, targets,
                       kl_temp=KL_TEMP, loss_weights=LOSS_WEIGHTS):
    """Pure-JAX reference mirroring the PyTorch forward, for correctness checking."""
    b, c = student_logits.shape
    target = targets.reshape(-1, targets.shape[-1])
    labels = target[:, 0].astype(jnp.int32)
    log_p = jax.nn.log_softmax(student_logits, axis=1)
    ce = -jnp.mean(jnp.take_along_axis(log_p, labels[:, None], axis=1))
    log_q = jax.nn.log_softmax(student_logits / kl_temp, axis=1)
    p_t = jax.nn.softmax(teacher_logits / kl_temp, axis=1)
    kl = jnp.mean(p_t * (jnp.log(p_t) - log_q)) * kl_temp ** 2
    return loss_weights[0] * ce + loss_weights[1] * kl + loss_weights[2] * 0.0


if __name__ == "__main__":
    key = jax.random.PRNGKey(0)
    k1, k2, k3, k4 = jax.random.split(key, 4)

    # Small shape consistent with the module (num_classes=10, hard-label branch, p=1).
    B, C, P, CT = 8, NUM_CLASSES, 1, 8
    student_logits = jax.random.normal(k1, (B, C), dtype=jnp.float32)
    teacher_logits = jax.random.normal(k2, (B, C), dtype=jnp.float32)
    labels = jax.random.randint(k3, (B,), 0, C).astype(jnp.float32)
    targets = jnp.concatenate(
        [labels[:, None], jax.random.normal(k4, (B, CT - 1), dtype=jnp.float32)], axis=1
    ).reshape(B, P, CT)

    total = jax.block_until_ready(policy_loss_forward(student_logits, teacher_logits, targets))
    ref = _reference_forward(student_logits, teacher_logits, targets)
    assert jnp.allclose(total, ref, rtol=1e-5, atol=1e-5), (total, ref)

    # Tiled / masked (ragged + possibly duplicated-tile) path with bf16 inputs in native dtype.
    B2 = 300
    kb = jax.random.split(jax.random.PRNGKey(1), 4)
    s2 = jax.random.normal(kb[0], (B2, C), dtype=jnp.bfloat16)
    t2 = jax.random.normal(kb[1], (B2, C), dtype=jnp.bfloat16)
    l2 = jax.random.randint(kb[2], (B2,), 0, C).astype(jnp.float32)
    tg2 = jnp.concatenate(
        [l2[:, None], jax.random.normal(kb[3], (B2, CT - 1), dtype=jnp.float32)], axis=1
    ).reshape(B2, 1, CT)
    total2 = jax.block_until_ready(policy_loss_forward(s2, t2, tg2, tile_b=128))
    ref2 = _reference_forward(s2.astype(jnp.float32), t2.astype(jnp.float32), tg2)
    assert jnp.allclose(total2, ref2, rtol=1e-4, atol=1e-4), (total2, ref2)

    # Aligned multi-tile fast path (mask statically compiled out, VMEM accumulation across tiles).
    B3 = 512
    kc = jax.random.split(jax.random.PRNGKey(2), 4)
    s3 = jax.random.normal(kc[0], (B3, C), dtype=jnp.float32)
    t3 = jax.random.normal(kc[1], (B3, C), dtype=jnp.float32)
    l3 = jax.random.randint(kc[2], (B3,), 0, C).astype(jnp.float32)
    tg3 = jnp.concatenate(
        [l3[:, None], jax.random.normal(kc[3], (B3, CT - 1), dtype=jnp.float32)], axis=1
    ).reshape(B3, 1, CT)
    total3 = jax.block_until_ready(policy_loss_forward(s3, t3, tg3, tile_b=256))
    ref3 = _reference_forward(s3, t3, tg3)
    assert jnp.allclose(total3, ref3, rtol=1e-5, atol=1e-5), (total3, ref3)

    print("KERNEL_OK")
</pallas_src>

<mosaic_0001>
module attributes {stable_mosaic.version = 11 : i64} {
  func.func @_policy_loss_kernel(%arg0: i32, %arg1: i32, %arg2: memref<8x1xi32, #tpu.memory_space<vmem>>, %arg3: memref<8x10xf32, #tpu.memory_space<vmem>>, %arg4: memref<8x10xf32, #tpu.memory_space<vmem>>, %arg5: memref<1x2xf32, #tpu.memory_space<smem>>, %arg6: memref<8x1xf32, #tpu.memory_space<vmem>>, %arg7: memref<8x1xf32, #tpu.memory_space<vmem>>) attributes {dimension_semantics = [#tpu.dimension_semantics<parallel>, #tpu.dimension_semantics<arbitrary>], iteration_bounds = array<i64: 1, 1>, scalar_prefetch = 0 : i64, scratch_operands = 2 : i64, tpu.core_type = #tpu.core_type<tc>, window_params = [{transform_indices = @transform_0, window_bounds = array<i64: 8, 1>}, {transform_indices = @transform_1, window_bounds = array<i64: 8, 10>}, {transform_indices = @transform_2, window_bounds = array<i64: 8, 10>}, {transform_indices = @transform_3, window_bounds = array<i64: 1, 2>}]} {
    %c0_i32 = arith.constant 0 : i32
    %0 = arith.cmpi eq, %arg1, %c0_i32 : i32
    %1 = arith.extui %0 : i1 to i32
    %c0_i32_0 = arith.constant 0 : i32
    %2 = arith.cmpi ne, %1, %c0_i32_0 : i32
    scf.if %2 {
      %cst_25 = arith.constant 0.000000e+00 : f32
      %55 = vector.broadcast %cst_25 : f32 to vector<8x1xf32>
      %c0_26 = arith.constant 0 : index
      %c0_27 = arith.constant 0 : index
      %56 = vector.load %arg6[%c0_26, %c0_27] : memref<8x1xf32, #tpu.memory_space<vmem>>, vector<8x1xf32>
      tpu.vector_store %arg6[%c0_26, %c0_27], %55 {strides = array<i32>} : memref<8x1xf32, #tpu.memory_space<vmem>>, vector<8x1xf32>,
      %cst_28 = arith.constant 0.000000e+00 : f32
      %57 = vector.broadcast %cst_28 : f32 to vector<8x1xf32>
      %c0_29 = arith.constant 0 : index
      %c0_30 = arith.constant 0 : index
      %58 = vector.load %arg7[%c0_29, %c0_30] : memref<8x1xf32, #tpu.memory_space<vmem>>, vector<8x1xf32>
      tpu.vector_store %arg7[%c0_29, %c0_30], %57 {strides = array<i32>} : memref<8x1xf32, #tpu.memory_space<vmem>>, vector<8x1xf32>,
    } else {
    }
    %c0 = arith.constant 0 : index
    %c0_1 = arith.constant 0 : index
    %3 = vector.load %arg3[%c0, %c0_1] : memref<8x10xf32, #tpu.memory_space<vmem>>, vector<8x10xf32>
    %c0_2 = arith.constant 0 : index
    %c0_3 = arith.constant 0 : index
    %4 = vector.load %arg4[%c0_2, %c0_3] : memref<8x10xf32, #tpu.memory_space<vmem>>, vector<8x10xf32>
    %c0_4 = arith.constant 0 : index
    %c0_5 = arith.constant 0 : index
    %5 = vector.load %arg2[%c0_4, %c0_5] : memref<8x1xi32, #tpu.memory_space<vmem>>, vector<8x1xi32>
    %cst = arith.constant dense<0xFF800000> : vector<8xf32>
    %6 = vector.multi_reduction <maximumf>, %3, %cst [1] : vector<8x10xf32> to vector<8xf32>
    %7 = vector.shape_cast %6 : vector<8xf32> to vector<8x1xf32>
    %8 = vector.broadcast %7 : vector<8x1xf32> to vector<8x10xf32>
    %9 = arith.subf %3, %8 : vector<8x10xf32>
    %10 = math.exp %9 : vector<8x10xf32>
    %cst_6 = arith.constant dense<0.000000e+00> : vector<8xf32>
    %11 = vector.multi_reduction <add>, %10, %cst_6 [1] : vector<8x10xf32> to vector<8xf32>
    %12 = vector.shape_cast %11 : vector<8xf32> to vector<8x1xf32>
    %13 = math.log %12 : vector<8x1xf32>
    %14 = tpu.iota {dimensions = array<i32: 1>} : vector<8x10xi32>
    %15 = vector.broadcast %5 : vector<8x1xi32> to vector<8x10xi32>
    %16 = arith.cmpi eq, %14, %15 : vector<8x10xi32>
    %cst_7 = arith.constant 0.000000e+00 : f32
    %17 = vector.broadcast %cst_7 : f32 to vector<8x10xf32>
    %18 = arith.select %16, %9, %17 : vector<8x10xi1>, vector<8x10xf32>
    %cst_8 = arith.constant dense<0.000000e+00> : vector<8xf32>
    %19 = vector.multi_reduction <add>, %18, %cst_8 [1] : vector<8x10xf32> to vector<8xf32>
    %20 = vector.shape_cast %19 : vector<8xf32> to vector<8x1xf32>
    %21 = arith.subf %13, %20 : vector<8x1xf32>
    %cst_9 = arith.constant 2.500000e-01 : f32
    %22 = vector.broadcast %cst_9 : f32 to vector<8x10xf32>
    %23 = arith.mulf %9, %22 : vector<8x10xf32>
    %24 = math.exp %23 : vector<8x10xf32>
    %cst_10 = arith.constant dense<0.000000e+00> : vector<8xf32>
    %25 = vector.multi_reduction <add>, %24, %cst_10 [1] : vector<8x10xf32> to vector<8xf32>
    %26 = vector.shape_cast %25 : vector<8xf32> to vector<8x1xf32>
    %27 = math.log %26 : vector<8x1xf32>
    %cst_11 = arith.constant 2.500000e-01 : f32
    %28 = vector.broadcast %cst_11 : f32 to vector<8x10xf32>
    %29 = arith.mulf %4, %28 : vector<8x10xf32>
    %cst_12 = arith.constant dense<0xFF800000> : vector<8xf32>
    %30 = vector.multi_reduction <maximumf>, %29, %cst_12 [1] : vector<8x10xf32> to vector<8xf32>
    %31 = vector.shape_cast %30 : vector<8xf32> to vector<8x1xf32>
    %32 = vector.broadcast %31 : vector<8x1xf32> to vector<8x10xf32>
    %33 = arith.subf %29, %32 : vector<8x10xf32>
    %34 = math.exp %33 : vector<8x10xf32>
    %cst_13 = arith.constant dense<0.000000e+00> : vector<8xf32>
    %35 = vector.multi_reduction <add>, %34, %cst_13 [1] : vector<8x10xf32> to vector<8xf32>
    %36 = vector.shape_cast %35 : vector<8xf32> to vector<8x1xf32>
    %37 = arith.subf %33, %23 : vector<8x10xf32>
    %38 = arith.mulf %34, %37 : vector<8x10xf32>
    %cst_14 = arith.constant dense<0.000000e+00> : vector<8xf32>
    %39 = vector.multi_reduction <add>, %38, %cst_14 [1] : vector<8x10xf32> to vector<8xf32>
    %40 = vector.shape_cast %39 : vector<8xf32> to vector<8x1xf32>
    %41 = tpu.reciprocal %36 : vector<8x1xf32> -> vector<8x1xf32>
    %42 = arith.mulf %40, %41 : vector<8x1xf32>
    %43 = math.log %36 : vector<8x1xf32>
    %44 = arith.subf %27, %43 : vector<8x1xf32>
    %45 = arith.addf %42, %44 : vector<8x1xf32>
    %c0_15 = arith.constant 0 : index
    %c0_16 = arith.constant 0 : index
    %46 = vector.load %arg6[%c0_15, %c0_16] : memref<8x1xf32, #tpu.memory_space<vmem>>, vector<8x1xf32>
    %47 = arith.addf %46, %21 : vector<8x1xf32>
    %c0_17 = arith.constant 0 : index
    %c0_18 = arith.constant 0 : index
    %48 = vector.load %arg6[%c0_17, %c0_18] : memref<8x1xf32, #tpu.memory_space<vmem>>, vector<8x1xf32>
    tpu.vector_store %arg6[%c0_17, %c0_18], %47 {strides = array<i32>} : memref<8x1xf32, #tpu.memory_space<vmem>>, vector<8x1xf32>,
    %c0_19 = arith.constant 0 : index
    %c0_20 = arith.constant 0 : index
    %49 = vector.load %arg7[%c0_19, %c0_20] : memref<8x1xf32, #tpu.memory_space<vmem>>, vector<8x1xf32>
    %50 = arith.addf %49, %45 : vector<8x1xf32>
    %c0_21 = arith.constant 0 : index
    %c0_22 = arith.constant 0 : index
    %51 = vector.load %arg7[%c0_21, %c0_22] : memref<8x1xf32, #tpu.memory_space<vmem>>, vector<8x1xf32>
    tpu.vector_store %arg7[%c0_21, %c0_22], %50 {strides = array<i32>} : memref<8x1xf32, #tpu.memory_space<vmem>>, vector<8x1xf32>,
    %c0_i32_23 = arith.constant 0 : i32
    %52 = arith.cmpi eq, %arg1, %c0_i32_23 : i32
    %53 = arith.extui %52 : i1 to i32
    %c0_i32_24 = arith.constant 0 : i32
    %54 = arith.cmpi ne, %53, %c0_i32_24 : i32
    scf.if %54 {
      %c0_25 = arith.constant 0 : index
      %c0_26 = arith.constant 0 : index
      %55 = vector.load %arg6[%c0_25, %c0_26] : memref<8x1xf32, #tpu.memory_space<vmem>>, vector<8x1xf32>
      %56 = vector.shape_cast %55 : vector<8x1xf32> to vector<1x8x1xf32>
      %cst_27 = arith.constant dense<0.000000e+00> : vector<1xf32>
      %57 = vector.multi_reduction <add>, %56, %cst_27 [1, 2] : vector<1x8x1xf32> to vector<1xf32>
      %58 = vector.shape_cast %57 : vector<1xf32> to vector<1x1x1xf32>
      %59 = vector.extract %58[0, 0, 0] : f32 from vector<1x1x1xf32>
      %c0_28 = arith.constant 0 : index
      %c0_29 = arith.constant 0 : index
      %60 = memref.load %arg5[%c0_28, %c0_29] : memref<1x2xf32, #tpu.memory_space<smem>>
      memref.store %59, %arg5[%c0_28, %c0_29] : memref<1x2xf32, #tpu.memory_space<smem>>
      %c0_30 = arith.constant 0 : index
      %c0_31 = arith.constant 0 : index
      %61 = vector.load %arg7[%c0_30, %c0_31] : memref<8x1xf32, #tpu.memory_space<vmem>>, vector<8x1xf32>
      %62 = vector.shape_cast %61 : vector<8x1xf32> to vector<1x8x1xf32>
      %cst_32 = arith.constant dense<0.000000e+00> : vector<1xf32>
      %63 = vector.multi_reduction <add>, %62, %cst_32 [1, 2] : vector<1x8x1xf32> to vector<1xf32>
      %64 = vector.shape_cast %63 : vector<1xf32> to vector<1x1x1xf32>
      %65 = vector.extract %64[0, 0, 0] : f32 from vector<1x1x1xf32>
      %c0_33 = arith.constant 0 : index
      %c1 = arith.constant 1 : index
      %66 = memref.load %arg5[%c0_33, %c1] : memref<1x2xf32, #tpu.memory_space<smem>>
      memref.store %65, %arg5[%c0_33, %c1] : memref<1x2xf32, #tpu.memory_space<smem>>
    } else {
    }
    return
  }
  func.func @transform_0(%arg0: i32, %arg1: i32) -> (i32, i32) {
    %c1_i32 = arith.constant 1 : i32
    %0 = arith.muli %arg0, %c1_i32 : i32
    %1 = arith.addi %0, %arg1 : i32
    %c0_i32 = arith.constant 0 : i32
    %2 = arith.minsi %1, %c0_i32 : i32
    %c0_i32_0 = arith.constant 0 : i32
    %c0_i32_1 = arith.constant 0 : i32
    return %2, %c0_i32_0 : i32, i32
  }
  func.func @transform_1(%arg0: i32, %arg1: i32) -> (i32, i32) {
    %c1_i32 = arith.constant 1 : i32
    %0 = arith.muli %arg0, %c1_i32 : i32
    %1 = arith.addi %0, %arg1 : i32
    %c0_i32 = arith.constant 0 : i32
    %2 = arith.minsi %1, %c0_i32 : i32
    %c0_i32_0 = arith.constant 0 : i32
    %c0_i32_1 = arith.constant 0 : i32
    return %2, %c0_i32_0 : i32, i32
  }
  func.func @transform_2(%arg0: i32, %arg1: i32) -> (i32, i32) {
    %c1_i32 = arith.constant 1 : i32
    %0 = arith.muli %arg0, %c1_i32 : i32
    %1 = arith.addi %0, %arg1 : i32
    %c0_i32 = arith.constant 0 : i32
    %2 = arith.minsi %1, %c0_i32 : i32
    %c0_i32_0 = arith.constant 0 : i32
    %c0_i32_1 = arith.constant 0 : i32
    return %2, %c0_i32_0 : i32, i32
  }
  func.func @transform_3(%arg0: i32, %arg1: i32) -> (i32, i32) {
    %c0_i32 = arith.constant 0 : i32
    %c0_i32_0 = arith.constant 0 : i32
    return %arg0, %c0_i32 : i32, i32
  }
}

</mosaic_0001>

<llo_original>
// kernel: tpu_custom_call.1
$region0: #{tpu_custom_call.1}
  #allocation0 [shape = 'u32[]', space=smem, size = 0x4, offset = 0x4, fixed_abs, tag = 'smem constant byte address 0x4 - core index']
  #allocation1 [shape = 'u32[144,128]{1,0:T(1,128)}', space=vmem, size = 0x12000, scoped, tag = 'internal scratch']
  #allocation2 [shape = 'f32[8,1]{1,0:T(8,128)}', space=vmem, size = 0x1000, scoped, tag = 'scratch operand']
  #allocation3 [shape = 'f32[8,1]{1,0:T(8,128)}', space=vmem, size = 0x1000, scoped, tag = 'scratch operand']
  %s0 = inlined_call_operand.vmem [shape: s32[8,1], index: 0, kind: input, shape index: {}]
  %s1 = inlined_call_operand.vmem [shape: f32[8,10], index: 1, kind: input, shape index: {}]
  %s2 = inlined_call_operand.vmem [shape: f32[8,10], index: 2, kind: input, shape index: {}]
  %s3 = inlined_call_operand.hbm [shape: f32[1,2], index: 3, kind: output, shape index: {}]
  %s4 = sld [smem:[#allocation0]]
  $region30: #{tpu_custom_call.1} parent=0
    _
  %s6 = ssub.s32 1, %s4
  %s7 = scalar_select 0, %s6, %s4
  $region1: #{tpu_custom_call.1} parent=0
    #allocation4 [shape = 'u8[512]{0}', space=smem, size = 0x200, scoped, tag = 'output window, operand 0, single buffered']
    #allocation5 [shape = 's32[1]{0}', space=sflag, size = 0x4, scoped, tag = 'scoped memory for tpu_custom_call.1']
    %8 = vsyncpa [#allocation5], 0
    // Predicated region
    $region2: #{tpu_custom_call.1} parent=1 // pred_check
      _
    $region3: #{tpu_custom_call.1} parent=1 // pred_check_branch
      %10 = sbr.rel (0) target = $region5
    $region4: #{tpu_custom_call.1} parent=1 // pred_region
      %s11 = sadd.s32 0, 0
      %p12 = scmp.lt.s32.totalorder %s11, 0
      %s13 = scalar_select %p12, %s11, 0
      %p14 = scmp.lt.s32.totalorder %s13, 0
      %s15 = scalar_select %p14, %s13, 0
      %s16 = smul.addr %s15, 8
      %s17 = scalar_lea.vmem %s0, %s16
      %s18 = sadd.s32 0, 0
      %p19 = scmp.lt.s32.totalorder %s18, 0
      %s20 = scalar_select %p19, %s18, 0
    $region5: #{tpu_custom_call.1} parent=1 // pred_fallthru
      _
    // Predicated region
    $region6: #{tpu_custom_call.1} parent=1 // pred_check
      _
    $region7: #{tpu_custom_call.1} parent=1 // pred_check_branch
      %22 = sbr.rel (0) target = $region9
    $region8: #{tpu_custom_call.1} parent=1 // pred_region
      %s23 = sadd.s32 0, 0
      %p24 = scmp.lt.s32.totalorder %s23, 0
      %s25 = scalar_select %p24, %s23, 0
      %p26 = scmp.lt.s32.totalorder %s25, 0
      %s27 = scalar_select %p26, %s25, 0
      %s28 = smul.addr %s27, 8
      %s29 = scalar_lea.vmem %s1, %s28
      %s30 = sadd.s32 0, 0
      %p31 = scmp.lt.s32.totalorder %s30, 0
      %s32 = scalar_select %p31, %s30, 0
    $region9: #{tpu_custom_call.1} parent=1 // pred_fallthru
      _
    // Predicated region
    $region10: #{tpu_custom_call.1} parent=1 // pred_check
      _
    $region11: #{tpu_custom_call.1} parent=1 // pred_check_branch
      %34 = sbr.rel (0) target = $region13
    $region12: #{tpu_custom_call.1} parent=1 // pred_region
      %s35 = sadd.s32 0, 0
      %p36 = scmp.lt.s32.totalorder %s35, 0
      %s37 = scalar_select %p36, %s35, 0
      %p38 = scmp.lt.s32.totalorder %s37, 0
      %s39 = scalar_select %p38, %s37, 0
      %s40 = smul.addr %s39, 8
      %s41 = scalar_lea.vmem %s2, %s40
      %s42 = sadd.s32 0, 0
      %p43 = scmp.lt.s32.totalorder %s42, 0
      %s44 = scalar_select %p43, %s42, 0
    $region13: #{tpu_custom_call.1} parent=1 // pred_fallthru
      _
    %s45 = sadd.s32 0, 0
    %p46 = scmp.lt.s32.totalorder %s45, 0
    %s47 = scalar_select %p46, %s45, 0
    %p48 = scmp.lt.s32.totalorder %s47, 0
    %s49 = scalar_select %p48, %s47, 0
    %s50 = smul.addr %s49, 8
    %s51 = scalar_lea.vmem %s0, %s50
    %s52 = sadd.s32 0, 0
    %p53 = scmp.lt.s32.totalorder %s52, 0
    %s54 = scalar_select %p53, %s52, 0
    %p55 = scmp.lt.s32.totalorder %s54, 0
    %s56 = scalar_select %p55, %s54, 0
    %s57 = smul.addr %s56, 8
    %s58 = scalar_lea.vmem %s1, %s57
    %s59 = sadd.s32 0, 0
    %p60 = scmp.lt.s32.totalorder %s59, 0
    %s61 = scalar_select %p60, %s59, 0
    %p62 = scmp.lt.s32.totalorder %s61, 0
    %s63 = scalar_select %p62, %s61, 0
    %s64 = smul.addr %s63, 8
    %s65 = scalar_lea.vmem %s2, %s64
    %s66 = sadd.s32 0, 0
    %p67 = scmp.lt.s32.totalorder %s66, 0
    %s68 = scalar_select %p67, %s66, 0
    %p69 = scmp.lt.s32.totalorder %s68, 0
    %s70 = scalar_select %p69, %s68, 0
    %s71 = smul.addr %s70, 8
    %s72 = scalar_lea.vmem %s0, %s71
    %s73 = sadd.s32 0, 0
    %p74 = scmp.lt.s32.totalorder %s73, 0
    %s75 = scalar_select %p74, %s73, 0
    %s76 = sadd.s32 0, 0
    %p77 = scmp.lt.s32.totalorder %s76, 0
    %s78 = scalar_select %p77, %s76, 0
    %p79 = scmp.lt.s32.totalorder %s78, 0
    %s80 = scalar_select %p79, %s78, 0
    %s81 = smul.addr %s80, 8
    %s82 = scalar_lea.vmem %s1, %s81
    %s83 = sadd.s32 0, 0
    %p84 = scmp.lt.s32.totalorder %s83, 0
    %s85 = scalar_select %p84, %s83, 0
    %s86 = sadd.s32 0, 0
    %p87 = scmp.lt.s32.totalorder %s86, 0
    %s88 = scalar_select %p87, %s86, 0
    %p89 = scmp.lt.s32.totalorder %s88, 0
    %s90 = scalar_select %p89, %s88, 0
    %s91 = smul.addr %s90, 8
    %s92 = scalar_lea.vmem %s2, %s91
    %s93 = sadd.s32 0, 0
    %p94 = scmp.lt.s32.totalorder %s93, 0
    %s95 = scalar_select %p94, %s93, 0
    %p96 = scmp.eq.s32.totalorder 0, 0
    // Predicated region
    $region14: #{tpu_custom_call.1} parent=1 // pred_check
      %p97 = pneg %p96
    $region15: #{tpu_custom_call.1} parent=1 // pred_check_branch
      %99 = sbr.rel (%p97) target = $region17
    $region16: #{tpu_custom_call.1} parent=1 // pred_region
      %vm100 = vcmask 7168
      %101 = vst.msk [vmem:[#allocation2] sm:$0xff] %vm100, 0.0
      %102 = vst.msk [vmem:[#allocation3] sm:$0xff] %vm100, 0.0
    $region17: #{tpu_custom_call.1} parent=1 // pred_fallthru
      _
    %v103 = vld [vmem:[%s82] sm:$0xff]
    %v104 = vld [vmem:[%s92] sm:$0xff]
    %v105 = vld [vmem:[%s72] sm:$0xff]
    %vm106 = vcmask 80896
    %v107 = vsel %vm106, %v103, -inf
    %108 = vmax.xlane.f32.xlu0 %v107
    %v109 = vpop.xlane.xlu0 %108
    %v110 = vsub.f32 %v103, %v109
    %v111 = vmul.f32 %v110, 1.442695
    %v112 = vpow.pop %v111
    %v113 = vsel %vm106, %v112, 0.0
    %114 = vadd.xlane.f32.xlu0 %v113
    %v115 = vpop.xlane.xlu0 %114
    %v116 = vlog2.pop %v115
    %v117 = vmul.f32 %v116, 0.6931472
    %v118 = vlaneseq
    %v119 = vand.u32 %v118, 127
    %120 = vset.pattern.permute.xlu0 0
    %121 = vperm.xlu0 %120, %v105
    %v122 = vpop.permute.xlu0 %121
    %vm123 = vcmp.eq.s32.totalorder %v119, %v122
    %v124 = vsel %vm123, %v110, 0.0
    %v125 = vsel %vm106, %v124, 0.0
    %126 = vadd.xlane.f32.xlu0 %v125
    %v127 = vpop.xlane.xlu0 %126
    %v128 = vsub.f32 %v117, %v127
    %v129 = vmul.f32 %v110, 0.25
    %v130 = vmul.f32 %v129, 1.442695
    %v131 = vpow.pop %v130
    %v132 = vsel %vm106, %v131, 0.0
    %133 = vadd.xlane.f32.xlu0 %v132
    %v134 = vpop.xlane.xlu0 %133
    %v135 = vlog2.pop %v134
    %v136 = vmul.f32 %v135, 0.6931472
    %v137 = vmul.f32 %v104, 0.25
    %v138 = vsel %vm106, %v137, -inf
    %139 = vmax.xlane.f32.xlu0 %v138
    %v140 = vpop.xlane.xlu0 %139
    %v141 = vsub.f32 %v137, %v140
    %v142 = vmul.f32 %v141, 1.442695
    %v143 = vpow.pop %v142
    %v144 = vsel %vm106, %v143, 0.0
    %145 = vadd.xlane.f32.xlu0 %v144
    %v146 = vpop.xlane.xlu0 %145
    %v147 = vsub.f32 %v141, %v129
    %v148 = vmul.f32 %v143, %v147
    %v149 = vsel %vm106, %v148, 0.0
    %150 = vadd.xlane.f32.xlu0 %v149
    %v151 = vpop.xlane.xlu0 %150
    %v152 = vrcp.pop %v146
    %v153 = vmul.f32 %v151, %v152
    %v154 = vlog2.pop %v146
    %v155 = vmul.f32 %v154, 0.6931472
    %v156 = vsub.f32 %v136, %v155
    %v157 = vadd.f32 %v153, %v156
    %v158 = vld [vmem:[#allocation2] sm:$0xff]
    %v159 = vadd.f32 %v158, %v128
    %vm160 = vcmask 7168
    %161 = vst.msk [vmem:[#allocation2] sm:$0xff] %vm160, %v159
    %v162 = vld [vmem:[#allocation3] sm:$0xff]
    %v163 = vadd.f32 %v162, %v157
    %164 = vst.msk [vmem:[#allocation3] sm:$0xff] %vm160, %v163
    // Predicated region
    $region18: #{tpu_custom_call.1} parent=1 // pred_check
      %p165 = pneg %p96
    $region19: #{tpu_custom_call.1} parent=1 // pred_check_branch
      %167 = sbr.rel (%p165) target = $region21
    $region20: #{tpu_custom_call.1} parent=1 // pred_region
      %v168 = vld [vmem:[#allocation2] sm:$0xff]
      %v169 = vsel %vm160, %v168, 0.0
      %170 = vadd.xlane.f32.xlu0 %v169
      %v171 = vpop.xlane.xlu0 %170
      %v172 = vrot.slane %v171, 4
      %v173 = vadd.f32 %v171, %v172
      %v174 = vrot.slane %v173, 2
      %v175 = vadd.f32 %v173, %v174
      %v176 = vrot.slane %v175, 1
      %v177 = vadd.f32 %v175, %v176
      %s178 = vtos %v177
      %s179 = scalar_lea.smem [#allocation4], 0
      %180 = sst [smem:[%s179]] %s178
      %v181 = vld [vmem:[#allocation3] sm:$0xff]
      %v182 = vsel %vm160, %v181, 0.0
      %183 = vadd.xlane.f32.xlu0 %v182
      %v184 = vpop.xlane.xlu0 %183
      %v185 = vrot.slane %v184, 4
      %v186 = vadd.f32 %v184, %v185
      %v187 = vrot.slane %v186, 2
      %v188 = vadd.f32 %v186, %v187
      %v189 = vrot.slane %v188, 1
      %v190 = vadd.f32 %v188, %v189
      %s191 = vtos %v190
      %s192 = scalar_lea.smem [#allocation4], 1
      %193 = sst [smem:[%s192]] %s191
    $region21: #{tpu_custom_call.1} parent=1 // pred_fallthru
      _
    // Predicated region
    $region22: #{tpu_custom_call.1} parent=1 // pred_check
      _
    $region23: #{tpu_custom_call.1} parent=1 // pred_check_branch
      %195 = sbr.rel (0) target = $region25
    $region24: #{tpu_custom_call.1} parent=1 // pred_region
      %s197 = ssub.s32 16, 16
      %198 = vsyncadd [#allocation5], %s197
      %201 = dma.smem_to_hbm [#allocation4], 16, %s3, [#allocation5]
    $region25: #{tpu_custom_call.1} parent=1 // pred_fallthru
      _
    // Predicated region
    $region26: #{tpu_custom_call.1} parent=1 // pred_check
      _
    $region27: #{tpu_custom_call.1} parent=1 // pred_check_branch
      %203 = sbr.rel (0) target = $region29
    $region28: #{tpu_custom_call.1} parent=1 // pred_region
      %204 = dma.done [#allocation5], 16
    $region29: #{tpu_custom_call.1} parent=1 // pred_fallthru
      _
    %205 = sfence
    %206 = vsyncpa [#allocation5], 1

</llo_original>
